<compile_context>
chip_gen: v6e
topology: v6e:2x2x1
jax: 0.10.0
libtpu: 0.0.40
codegen_flags: <defaults>
</compile_context>

<pallas_src>
import functools

import jax
import jax.numpy as jnp
from jax.experimental import pallas as pl
from jax.experimental.pallas import tpu as pltpu


def _round_up(n: int, m: int) -> int:
    return ((n + m - 1) // m) * m


def ffn_kernel(x_ref, w1_ref, b1_ref, w2_ref, b2_ref, o_ref):
    # Linear(embeddings_dim -> hidden_dim), fp32 accumulation on the MXU.
    h = jnp.dot(x_ref[...], w1_ref[...],
                preferred_element_type=jnp.float32) + b1_ref[...]
    # Dropout: identity at inference.
    # TODO(synk): training-mode dropout (p=0.25) not implemented; eval semantics only.
    # ReLU. (BatchNorm was folded into w2/b2 in the wrapper.)
    h = jnp.maximum(h, 0.0)
    # Output Linear(hidden_dim -> output_dim_padded), fp32 accumulation.
    o_ref[...] = (jnp.dot(h.astype(w2_ref.dtype), w2_ref[...],
                          preferred_element_type=jnp.float32)
                  + b2_ref[...]).astype(o_ref.dtype)


def ffn_forward(x, params, *, block_b: int = 512,
                compute_dtype=jnp.bfloat16):
    """x: [B, E] float32. params: dict of weights (see init_params)."""
    B, E = x.shape
    H = params["w1"].shape[1]
    O = params["w2"].shape[1]

    # ---- Fold eval-mode BatchNorm1d into the output linear (done in fp32). ----
    scale = params["gamma"] * jax.lax.rsqrt(params["var"] + 1e-5)   # [1, H]
    shift = params["beta"] - params["mean"] * scale                 # [1, H]
    w2_f = scale.reshape(H, 1) * params["w2"]                       # [H, O]
    b2_f = params["b2"] + shift @ params["w2"]                      # [1, O]

    # ---- Lane-dense / vreg-aligned padding (zeros are exact no-ops). ----
    H_pad = _round_up(H, 128)
    O_pad = _round_up(O, 128)
    w1_p = jnp.zeros((E, H_pad), jnp.float32).at[:, :H].set(params["w1"])
    b1_p = jnp.zeros((1, H_pad), jnp.float32).at[:, :H].set(params["b1"])
    w2_p = jnp.zeros((H_pad, O_pad), jnp.float32).at[:H, :O].set(w2_f)
    b2_p = jnp.zeros((1, O_pad), jnp.float32).at[:, :O].set(b2_f)

    # MXU-friendly operand dtypes (accumulation stays fp32 inside the kernel).
    x_c = x.astype(compute_dtype)
    w1_c = w1_p.astype(compute_dtype)
    w2_c = w2_p.astype(compute_dtype)

    # ---- Batch tiling: pad B up to a multiple of the batch tile. ----
    TB = min(block_b, B)
    B_pad = pl.cdiv(B, TB) * TB
    if B_pad != B:
        x_c = jnp.pad(x_c, ((0, B_pad - B), (0, 0)))
    grid = (B_pad // TB,)

    cost = pl.CostEstimate(
        flops=2 * B_pad * (E * H_pad + H_pad * O_pad),
        transcendentals=0,
        bytes_accessed=(B_pad * E * x_c.dtype.itemsize
                        + E * H_pad * w1_c.dtype.itemsize
                        + H_pad * O_pad * w2_c.dtype.itemsize
                        + (H_pad + O_pad) * 4
                        + B_pad * O_pad * 4),
    )

    resident = lambda shape: pl.BlockSpec(shape, lambda i: (0, 0))

    out_padded = pl.pallas_call(
        ffn_kernel,
        out_shape=jax.ShapeDtypeStruct((B_pad, O_pad), jnp.float32),
        grid_spec=pltpu.PrefetchScalarGridSpec(
            num_scalar_prefetch=0,
            grid=grid,
            in_specs=[
                pl.BlockSpec((TB, E), lambda i: (i, 0)),   # x (streamed over batch)
                resident((E, H_pad)),                      # w1 (VMEM-resident)
                resident((1, H_pad)),                      # b1
                resident((H_pad, O_pad)),                  # w2 (BN folded)
                resident((1, O_pad)),                      # b2 (BN folded)
            ],
            out_specs=pl.BlockSpec((TB, O_pad), lambda i: (i, 0)),
        ),
        compiler_params=pltpu.CompilerParams(
            dimension_semantics=("parallel",)),
        cost_estimate=cost,
    )(x_c, w1_c, b1_p, w2_c, b2_p)

    # Un-pad outside the kernel (lane-dense store inside, cheap slice here).
    return out_padded[:B, :O]


def init_params(key, embeddings_dim=128, hidden_dim=32, output_dim=12):
    k1, k2, k3, k4, k5, k6 = jax.random.split(key, 6)
    scale1 = 1.0 / jnp.sqrt(embeddings_dim)
    scale2 = 1.0 / jnp.sqrt(hidden_dim)
    return {
        "w1": jax.random.uniform(k1, (embeddings_dim, hidden_dim),
                                 jnp.float32, -scale1, scale1),
        "b1": jax.random.uniform(k2, (1, hidden_dim), jnp.float32, -scale1, scale1),
        "gamma": jnp.ones((1, hidden_dim), jnp.float32),
        "beta": jnp.zeros((1, hidden_dim), jnp.float32),
        # deterministic non-trivial running stats
        "mean": 0.1 * jax.random.normal(k3, (1, hidden_dim), jnp.float32),
        "var": 1.0 + 0.1 * jax.random.uniform(k4, (1, hidden_dim), jnp.float32),
        "w2": jax.random.uniform(k5, (hidden_dim, output_dim),
                                 jnp.float32, -scale2, scale2),
        "b2": jax.random.uniform(k6, (1, output_dim), jnp.float32, -scale2, scale2),
    }


def ffn_reference(x, p):
    """Exact fp32 reference matching the PyTorch module in eval mode."""
    h = x @ p["w1"] + p["b1"]
    h = jnp.maximum(h, 0.0)                                   # Dropout = identity
    h = (h - p["mean"]) * jax.lax.rsqrt(p["var"] + 1e-5) * p["gamma"] + p["beta"]
    return h @ p["w2"] + p["b2"]


if __name__ == "__main__":
    key = jax.random.PRNGKey(0)
    kx, kp = jax.random.split(key)

    # Small shapes consistent with FFN.forward ([B, E] -> [B, O]).
    B, E, H, O = 256, 128, 32, 12
    x = jax.random.normal(kx, (B, E), jnp.float32)
    params = init_params(kp, embeddings_dim=E, hidden_dim=H, output_dim=O)

    ref = ffn_reference(x, params)

    # 1) fp32 kernel path: validates the BN fold + padding exactly.
    out_f32 = ffn_forward(x, params, block_b=128, compute_dtype=jnp.float32)
    out_f32 = jax.block_until_ready(out_f32)
    assert out_f32.shape == (B, O)
    assert jnp.allclose(out_f32, ref, atol=1e-4, rtol=1e-4), "fp32 mismatch vs reference"

    # 2) bf16-operand kernel path (default, MXU/HBM friendly): looser tolerance
    #    accounts only for bf16 rounding of x/w1/w2 (accumulation is fp32).
    out_bf16 = ffn_forward(x, params, block_b=128)   # grid of 2 batch tiles
    out_bf16 = jax.block_until_ready(out_bf16)
    assert out_bf16.shape == (B, O)
    assert jnp.allclose(out_bf16, ref, atol=5e-2, rtol=5e-2), "bf16 mismatch vs reference"

    print("KERNEL_OK")
</pallas_src>

<mosaic_0001>
module attributes {stable_mosaic.version = 11 : i64} {
  func.func @ffn_kernel(%arg0: i32, %arg1: memref<128x128xf32, #tpu.memory_space<vmem>>, %arg2: memref<128x128xf32, #tpu.memory_space<vmem>>, %arg3: memref<1x128xf32, #tpu.memory_space<vmem>>, %arg4: memref<128x128xf32, #tpu.memory_space<vmem>>, %arg5: memref<1x128xf32, #tpu.memory_space<vmem>>, %arg6: memref<128x128xf32, #tpu.memory_space<vmem>>) attributes {dimension_semantics = [#tpu.dimension_semantics<parallel>], iteration_bounds = array<i64: 2>, scalar_prefetch = 0 : i64, scratch_operands = 0 : i64, tpu.core_type = #tpu.core_type<tc>, window_params = [{transform_indices = @transform_0, window_bounds = array<i64: 128, 128>}, {pipeline_mode = #tpu.pipeline_mode<synchronous>, transform_indices = @transform_1, window_bounds = array<i64: 128, 128>}, {pipeline_mode = #tpu.pipeline_mode<synchronous>, transform_indices = @transform_2, window_bounds = array<i64: 1, 128>}, {pipeline_mode = #tpu.pipeline_mode<synchronous>, transform_indices = @transform_3, window_bounds = array<i64: 128, 128>}, {pipeline_mode = #tpu.pipeline_mode<synchronous>, transform_indices = @transform_4, window_bounds = array<i64: 1, 128>}, {transform_indices = @transform_5, window_bounds = array<i64: 128, 128>}]} {
    %c0 = arith.constant 0 : index
    %c0_0 = arith.constant 0 : index
    %0 = vector.load %arg1[%c0, %c0_0] : memref<128x128xf32, #tpu.memory_space<vmem>>, vector<128x128xf32>
    %c0_1 = arith.constant 0 : index
    %c0_2 = arith.constant 0 : index
    %1 = vector.load %arg2[%c0_1, %c0_2] : memref<128x128xf32, #tpu.memory_space<vmem>>, vector<128x128xf32>
    %cst = arith.constant dense<0.000000e+00> : vector<128x128xf32>
    %2 = tpu.matmul %0, %1, %cst {dimension_numbers = #tpu.dot_dimension_numbers<[1], [0], [0], [1], [0, 0, 1, 1], [], []>} : vector<128x128xf32>, vector<128x128xf32>, vector<128x128xf32> -> vector<128x128xf32>
    %c0_3 = arith.constant 0 : index
    %c0_4 = arith.constant 0 : index
    %3 = vector.load %arg3[%c0_3, %c0_4] : memref<1x128xf32, #tpu.memory_space<vmem>>, vector<1x128xf32>
    %4 = vector.broadcast %3 : vector<1x128xf32> to vector<128x128xf32>
    %5 = arith.addf %2, %4 : vector<128x128xf32>
    %cst_5 = arith.constant 0.000000e+00 : f32
    %6 = vector.broadcast %cst_5 : f32 to vector<128x128xf32>
    %7 = arith.maximumf %5, %6 : vector<128x128xf32>
    %c0_6 = arith.constant 0 : index
    %c0_7 = arith.constant 0 : index
    %8 = vector.load %arg4[%c0_6, %c0_7] : memref<128x128xf32, #tpu.memory_space<vmem>>, vector<128x128xf32>
    %cst_8 = arith.constant dense<0.000000e+00> : vector<128x128xf32>
    %9 = tpu.matmul %7, %8, %cst_8 {dimension_numbers = #tpu.dot_dimension_numbers<[1], [0], [0], [1], [0, 0, 1, 1], [], []>} : vector<128x128xf32>, vector<128x128xf32>, vector<128x128xf32> -> vector<128x128xf32>
    %c0_9 = arith.constant 0 : index
    %c0_10 = arith.constant 0 : index
    %10 = vector.load %arg5[%c0_9, %c0_10] : memref<1x128xf32, #tpu.memory_space<vmem>>, vector<1x128xf32>
    %11 = vector.broadcast %10 : vector<1x128xf32> to vector<128x128xf32>
    %12 = arith.addf %9, %11 : vector<128x128xf32>
    %c0_11 = arith.constant 0 : index
    %c0_12 = arith.constant 0 : index
    %13 = vector.load %arg6[%c0_11, %c0_12] : memref<128x128xf32, #tpu.memory_space<vmem>>, vector<128x128xf32>
    tpu.vector_store %arg6[%c0_11, %c0_12], %12 {strides = array<i32>} : memref<128x128xf32, #tpu.memory_space<vmem>>, vector<128x128xf32>,
    return
  }
  func.func @transform_0(%arg0: i32) -> (i32, i32) {
    %c0_i32 = arith.constant 0 : i32
    %c0_i32_0 = arith.constant 0 : i32
    return %arg0, %c0_i32 : i32, i32
  }
  func.func @transform_1(%arg0: i32) -> (i32, i32) {
    %c0_i32 = arith.constant 0 : i32
    %c0_i32_0 = arith.constant 0 : i32
    %c0_i32_1 = arith.constant 0 : i32
    return %c0_i32, %c0_i32_0 : i32, i32
  }
  func.func @transform_2(%arg0: i32) -> (i32, i32) {
    %c0_i32 = arith.constant 0 : i32
    %c0_i32_0 = arith.constant 0 : i32
    %c0_i32_1 = arith.constant 0 : i32
    return %c0_i32, %c0_i32_0 : i32, i32
  }
  func.func @transform_3(%arg0: i32) -> (i32, i32) {
    %c0_i32 = arith.constant 0 : i32
    %c0_i32_0 = arith.constant 0 : i32
    %c0_i32_1 = arith.constant 0 : i32
    return %c0_i32, %c0_i32_0 : i32, i32
  }
  func.func @transform_4(%arg0: i32) -> (i32, i32) {
    %c0_i32 = arith.constant 0 : i32
    %c0_i32_0 = arith.constant 0 : i32
    %c0_i32_1 = arith.constant 0 : i32
    return %c0_i32, %c0_i32_0 : i32, i32
  }
  func.func @transform_5(%arg0: i32) -> (i32, i32) {
    %c0_i32 = arith.constant 0 : i32
    %c0_i32_0 = arith.constant 0 : i32
    return %arg0, %c0_i32 : i32, i32
  }
}

</mosaic_0001>

<llo_original>
// kernel: tpu_custom_call.1
$region0: #{tpu_custom_call.1}
  #allocation0 [shape = 'u32[]', space=smem, size = 0x4, offset = 0x4, fixed_abs, tag = 'smem constant byte address 0x4 - core index']
  #allocation1 [shape = 'u32[144,128]{1,0:T(1,128)}', space=vmem, size = 0x12000, scoped, tag = 'internal scratch']
  %s0 = inlined_call_operand.hbm [shape: f32[256,128], index: 0, kind: input, shape index: {}]
  %s1 = inlined_call_operand.hbm [shape: f32[128,128], index: 1, kind: input, shape index: {}]
  %s2 = inlined_call_operand.vmem [shape: f32[1,128], index: 2, kind: input, shape index: {}]
  %s3 = inlined_call_operand.hbm [shape: f32[128,128], index: 3, kind: input, shape index: {}]
  %s4 = inlined_call_operand.vmem [shape: f32[1,128], index: 4, kind: input, shape index: {}]
  %s5 = inlined_call_operand.hbm [shape: f32[256,128], index: 5, kind: output, shape index: {}]
  %s6 = sld [smem:[#allocation0]]
  $region65: #{tpu_custom_call.1} parent=0
    _
  %s8 = ssub.s32 1, %s6
  %s9 = scalar_select 0, %s8, %s6
  $region1: #{tpu_custom_call.1} parent=0
    #allocation2 [shape = 'u8[131072]{0}', space=vmem, size = 0x20000, scoped, tag = 'input window, operand 0']
    #allocation3 [shape = 's32[2]{0}', space=sflag, size = 0x8, scoped, tag = 'scoped memory for tpu_custom_call.1']
    #allocation4 [shape = 's32[2]{0}', space=sflag, size = 0x8, scoped, tag = 'scoped memory for tpu_custom_call.1']
    #allocation5 [shape = 'u8[65536]{0}', space=vmem, size = 0x10000, scoped, tag = 'input window, operand 1, single buffered']
    #allocation6 [shape = 's32[1]{0}', space=sflag, size = 0x4, scoped, tag = 'scoped memory for tpu_custom_call.1']
    #allocation7 [shape = 'u8[65536]{0}', space=vmem, size = 0x10000, scoped, tag = 'input window, operand 3, single buffered']
    #allocation8 [shape = 'u8[131072]{0}', space=vmem, size = 0x20000, scoped, tag = 'output window, operand 0']
    %10 = vsyncpa [#allocation3], 0
    %s11 = scalar_lea.sflag [#allocation3], 1
    %12 = vsyncpa %s11, 0
    %13 = vsyncpa [#allocation6], 0
    %14 = vsyncpa [#allocation4], 0
    %s15 = scalar_lea.sflag [#allocation4], 1
    %16 = vsyncpa %s15, 0
    loop: start=0, step=1, limit=4
    $region2: #{tpu_custom_call.1} parent=1 // loop_pre_header
      _
    $region3: #{tpu_custom_call.1} parent=1 // loop_header
      %s18 = sphi 0, %s22
      %p19 = scmp.ge.s32.totalorder %s18, 4
      %s28 = sphi 0, %s30
      %s31 = sphi 0, %s28
      %s32 = sphi 0, %s31
      %s48 = sphi 0, %s32
      %s52 = sphi 0, %s52
      %s54 = sphi 0, %s52
      %s55 = sphi 0, %s54
      %s69 = sphi 0, %s55
      %s73 = sphi 0, %s73
      %s75 = sphi 0, %s73
      %s76 = sphi 0, %s75
      %s90 = sphi 0, %s76
      %s94 = sphi 0, %s94
      %s96 = sphi 0, %s94
      %s97 = sphi 0, %s96
      %s111 = sphi 0, %s97
      %s115 = sphi 0, %s115
      %s117 = sphi 0, %s115
      %s118 = sphi 0, %s117
      %s132 = sphi 0, %s118
      %s138 = sphi 0, %s140
      %s141 = sphi 0, %s138
      %s142 = sphi 0, %s141
      %s158 = sphi 0, %s142
    $region4: #{tpu_custom_call.1} parent=1 // loop_header_branch
      %21 = sbr.rel (%p19) target = $region8
    $region5: #{tpu_custom_call.1} parent=1 // loop_body
      %s23 = ssub.s32 %s18, 1
      %s24 = ssub.s32 %s18, 2
      %s25 = sadd.s32 %s18, 1
      %s26 = ssub.s32 %s18, %s25
      %p27 = scmp.eq.s32.totalorder %s26, 0
      %s29 = sadd.s32 %s28, 1
      %s30 = scalar_select %p27, %s28, %s29
      %p33 = pneg %p27
      %p34 = scmp.eq.s32.totalorder %s18, 1
      %p35 = por %p33, %p34
      %p36 = scmp.ne.s32.totalorder %s28, %s31
      %p37 = scmp.eq.s32.totalorder %s18, 0
      %p38 = por %p36, %p37
      %p39 = scmp.ne.s32.totalorder %s28, %s31
      %p40 = scmp.eq.s32.totalorder %s23, 1
      %p41 = por %p39, %p40
      %p42 = scmp.ne.s32.totalorder %s31, %s32
      %p43 = scmp.eq.s32.totalorder %s23, 0
      %p44 = por %p42, %p43
      %p45 = scmp.ne.s32.totalorder %s31, %s32
      %p46 = scmp.eq.s32.totalorder %s24, 1
      %p47 = por %p45, %p46
      %p49 = scmp.ne.s32.totalorder %s32, %s48
      %p50 = scmp.eq.s32.totalorder %s24, 0
      %p51 = por %p49, %p50
      %s53 = sadd.s32 %s52, 1
      %p56 = scmp.eq.s32.totalorder %s18, 1
      %p57 = scmp.ne.s32.totalorder %s52, %s54
      %p58 = scmp.eq.s32.totalorder %s18, 0
      %p59 = por %p57, %p58
      %p60 = scmp.ne.s32.totalorder %s52, %s54
      %p61 = scmp.eq.s32.totalorder %s23, 1
      %p62 = por %p60, %p61
      %p63 = scmp.ne.s32.totalorder %s54, %s55
      %p64 = scmp.eq.s32.totalorder %s23, 0
      %p65 = por %p63, %p64
      %p66 = scmp.ne.s32.totalorder %s54, %s55
      %p67 = scmp.eq.s32.totalorder %s24, 1
      %p68 = por %p66, %p67
      %p70 = scmp.ne.s32.totalorder %s55, %s69
      %p71 = scmp.eq.s32.totalorder %s24, 0
      %p72 = por %p70, %p71
      %s74 = sadd.s32 %s73, 1
      %p77 = scmp.eq.s32.totalorder %s18, 1
      %p78 = scmp.ne.s32.totalorder %s73, %s75
      %p79 = scmp.eq.s32.totalorder %s18, 0
      %p80 = por %p78, %p79
      %p81 = scmp.ne.s32.totalorder %s73, %s75
      %p82 = scmp.eq.s32.totalorder %s23, 1
      %p83 = por %p81, %p82
      %p84 = scmp.ne.s32.totalorder %s75, %s76
      %p85 = scmp.eq.s32.totalorder %s23, 0
      %p86 = por %p84, %p85
      %p87 = scmp.ne.s32.totalorder %s75, %s76
      %p88 = scmp.eq.s32.totalorder %s24, 1
      %p89 = por %p87, %p88
      %p91 = scmp.ne.s32.totalorder %s76, %s90
      %p92 = scmp.eq.s32.totalorder %s24, 0
      %p93 = por %p91, %p92
      %s95 = sadd.s32 %s94, 1
      %p98 = scmp.eq.s32.totalorder %s18, 1
      %p99 = scmp.ne.s32.totalorder %s94, %s96
      %p100 = scmp.eq.s32.totalorder %s18, 0
      %p101 = por %p99, %p100
      %p102 = scmp.ne.s32.totalorder %s94, %s96
      %p103 = scmp.eq.s32.totalorder %s23, 1
      %p104 = por %p102, %p103
      %p105 = scmp.ne.s32.totalorder %s96, %s97
      %p106 = scmp.eq.s32.totalorder %s23, 0
      %p107 = por %p105, %p106
      %p108 = scmp.ne.s32.totalorder %s96, %s97
      %p109 = scmp.eq.s32.totalorder %s24, 1
      %p110 = por %p108, %p109
      %p112 = scmp.ne.s32.totalorder %s97, %s111
      %p113 = scmp.eq.s32.totalorder %s24, 0
      %p114 = por %p112, %p113
      %s116 = sadd.s32 %s115, 1
      %p119 = scmp.eq.s32.totalorder %s18, 1
      %p120 = scmp.ne.s32.totalorder %s115, %s117
      %p121 = scmp.eq.s32.totalorder %s18, 0
      %p122 = por %p120, %p121
      %p123 = scmp.ne.s32.totalorder %s115, %s117
      %p124 = scmp.eq.s32.totalorder %s23, 1
      %p125 = por %p123, %p124
      %p126 = scmp.ne.s32.totalorder %s117, %s118
      %p127 = scmp.eq.s32.totalorder %s23, 0
      %p128 = por %p126, %p127
      %p129 = scmp.ne.s32.totalorder %s117, %s118
      %p130 = scmp.eq.s32.totalorder %s24, 1
      %p131 = por %p129, %p130
      %p133 = scmp.ne.s32.totalorder %s118, %s132
      %p134 = scmp.eq.s32.totalorder %s24, 0
      %p135 = por %p133, %p134
      %s136 = ssub.s32 %s18, %s25
      %p137 = scmp.eq.s32.totalorder %s136, 0
      %s139 = sadd.s32 %s138, 1
      %s140 = scalar_select %p137, %s138, %s139
      %p143 = pneg %p137
      %p144 = scmp.eq.s32.totalorder %s18, 1
      %p145 = por %p143, %p144
      %p146 = scmp.ne.s32.totalorder %s138, %s141
      %p147 = scmp.eq.s32.totalorder %s18, 0
      %p148 = por %p146, %p147
      %p149 = scmp.ne.s32.totalorder %s138, %s141
      %p150 = scmp.eq.s32.totalorder %s23, 1
      %p151 = por %p149, %p150
      %p152 = scmp.ne.s32.totalorder %s141, %s142
      %p153 = scmp.eq.s32.totalorder %s23, 0
      %p154 = por %p152, %p153
      %p155 = scmp.ne.s32.totalorder %s141, %s142
      %p156 = scmp.eq.s32.totalorder %s24, 1
      %p157 = por %p155, %p156
      %p159 = scmp.ne.s32.totalorder %s142, %s158
      %p160 = scmp.eq.s32.totalorder %s24, 0
      %p161 = por %p159, %p160
      %p162 = scmp.le.s32.totalorder 1, %s18
      %p163 = scmp.lt.s32.totalorder %s18, 3
      %p164 = pnand %p162, %p163
      %p165 = pneg %p164
      // Predicated region
      $region9: #{tpu_custom_call.1} parent=5 // pred_check
        _
      $region10: #{tpu_custom_call.1} parent=5 // pred_check_branch
        %167 = sbr.rel (%p164) target = $region12
      $region11: #{tpu_custom_call.1} parent=5 // pred_region
        %s168 = ssub.s32 %s18, 1
        // Predicated region
        $region13: #{tpu_custom_call.1} parent=11 // pred_check
          %p169 = pneg %p65
        $region14: #{tpu_custom_call.1} parent=11 // pred_check_branch
          %171 = sbr.rel (%p169) target = $region16
        $region15: #{tpu_custom_call.1} parent=11 // pred_region
          %s173 = ssub.s32 2048, 2048
          %174 = vsyncadd [#allocation6], %s173
          %s175 = sshll.u32 [#allocation5], 4
          %s176 = int_to_ptr.vmem [resolvable:$true] %s175
          %181 = dma.hbm_to_vmem [thread:$0]  %s1, 2048, %s176, [#allocation6], 128, 128, 8
        $region16: #{tpu_custom_call.1} parent=11 // pred_fallthru
          _
        // Predicated region
        $region17: #{tpu_custom_call.1} parent=11 // pred_check
          %p182 = pneg %p86
        $region18: #{tpu_custom_call.1} parent=11 // pred_check_branch
          %184 = sbr.rel (%p182) target = $region20
        $region19: #{tpu_custom_call.1} parent=11 // pred_region
          _
        $region20: #{tpu_custom_call.1} parent=11 // pred_fallthru
          _
        // Predicated region
        $region21: #{tpu_custom_call.1} parent=11 // pred_check
          %p185 = pneg %p107
        $region22: #{tpu_custom_call.1} parent=11 // pred_check_branch
          %187 = sbr.rel (%p185) target = $region24
        $region23: #{tpu_custom_call.1} parent=11 // pred_region
          %s189 = ssub.s32 2048, 2048
          %190 = vsyncadd [#allocation6], %s189
          %s191 = sshll.u32 [#allocation7], 4
          %s192 = int_to_ptr.vmem [resolvable:$true] %s191
          %197 = dma.hbm_to_vmem [thread:$0]  %s3, 2048, %s192, [#allocation6], 128, 128, 8
        $region24: #{tpu_custom_call.1} parent=11 // pred_fallthru
          _
        // Predicated region
        $region25: #{tpu_custom_call.1} parent=11 // pred_check
          %p198 = pneg %p128
        $region26: #{tpu_custom_call.1} parent=11 // pred_check_branch
          %200 = sbr.rel (%p198) target = $region28
        $region27: #{tpu_custom_call.1} parent=11 // pred_region
          _
        $region28: #{tpu_custom_call.1} parent=11 // pred_fallthru
          _
      $region12: #{tpu_custom_call.1} parent=5 // pred_fallthru
        _
      %p201 = scmp.lt.s32.totalorder %s18, 2
      // Predicated region
      $region29: #{tpu_custom_call.1} parent=5 // pred_check
        %p202 = pneg %p201
      $region30: #{tpu_custom_call.1} parent=5 // pred_check_branch
        %204 = sbr.rel (%p202) target = $region32
      $region31: #{tpu_custom_call.1} parent=5 // pred_region
        // Predicated region
        $region33: #{tpu_custom_call.1} parent=31 // pred_check
          %p205 = pneg %p38
        $region34: #{tpu_custom_call.1} parent=31 // pred_check_branch
          %207 = sbr.rel (%p205) target = $region36
        $region35: #{tpu_custom_call.1} parent=31 // pred_region
          %s208 = sand.u32 %s28, 1
          %s209 = scalar_lea.sflag [#allocation3], %s208
          %s210 = sand.u32 %s28, 1
          %s211 = smul.addr %s210, 128
          %s212 = scalar_lea.vmem [#allocation2], %s211
          %s213 = smul.u32 16, %s18
          %s215 = ssub.s32 2048, 2048
          %216 = vsyncadd %s209, %s215
          %s217 = smul.addr %s213, 128
          %s218 = scalar_lea.hbm %s0, %s217
          %s219 = sshll.u32 %s212, 4
          %s220 = int_to_ptr.vmem [resolvable:$true] %s219
          %225 = dma.hbm_to_vmem [thread:$0]  %s218, 2048, %s220, %s209, 128, 128, 8
        $region36: #{tpu_custom_call.1} parent=31 // pred_fallthru
          _
      $region32: #{tpu_custom_call.1} parent=5 // pred_fallthru
        _
      %p226 = scmp.le.s32.totalorder 1, %s18
      %p227 = scmp.lt.s32.totalorder %s18, 3
      %p228 = pnand %p226, %p227
      %p229 = pneg %p228
      // Predicated region
      $region37: #{tpu_custom_call.1} parent=5 // pred_check
        _
      $region38: #{tpu_custom_call.1} parent=5 // pred_check_branch
        %231 = sbr.rel (%p228) target = $region40
      $region39: #{tpu_custom_call.1} parent=5 // pred_region
        %s232 = ssub.s32 %s18, 1
        %s233 = sand.u32 %s31, 1
        %s234 = scalar_lea.sflag [#allocation3], %s233
        %s235 = sand.u32 %s31, 1
        %s236 = smul.addr %s235, 128
        %s237 = scalar_lea.vmem [#allocation2], %s236
        // Predicated region
        $region41: #{tpu_custom_call.1} parent=39 // pred_check
          %p238 = pneg %p44
        $region42: #{tpu_custom_call.1} parent=39 // pred_check_branch
          %240 = sbr.rel (%p238) target = $region44
        $region43: #{tpu_custom_call.1} parent=39 // pred_region
          %241 = dma.done %s234, 2048
        $region44: #{tpu_custom_call.1} parent=39 // pred_fallthru
          _
        // Predicated region
        $region45: #{tpu_custom_call.1} parent=39 // pred_check
          %p242 = pneg %p65
        $region46: #{tpu_custom_call.1} parent=39 // pred_check_branch
          %244 = sbr.rel (%p242) target = $region48
        $region47: #{tpu_custom_call.1} parent=39 // pred_region
          %245 = dma.done [#allocation6], 2048
        $region48: #{tpu_custom_call.1} parent=39 // pred_fallthru
          _
        // Predicated region
        $region49: #{tpu_custom_call.1} parent=39 // pred_check
          %p246 = pneg %p107
        $region50: #{tpu_custom_call.1} parent=39 // pred_check_branch
          %248 = sbr.rel (%p246) target = $region52
        $region51: #{tpu_custom_call.1} parent=39 // pred_region
          %249 = dma.done [#allocation6], 2048
        $region52: #{tpu_custom_call.1} parent=39 // pred_fallthru
          _
        %s250 = sand.u32 %s31, 1
        %s251 = scalar_lea.sflag [#allocation3], %s250
        %s252 = sand.u32 %s31, 1
        %s253 = smul.addr %s252, 128
        %s254 = scalar_lea.vmem [#allocation2], %s253
        %p255 = pneg %p44
        %p256 = pneg %p41
        %p257 = pneg %p65
        %p258 = pneg %p62
        %p259 = pneg %p86
        %p260 = pneg %p83
        %p261 = pneg %p107
        %p262 = pneg %p104
        %p263 = pneg %p128
        %p264 = pneg %p125
        %p265 = pneg %p154
        %p266 = pneg %p151
        %s267 = sand.u32 %s141, 1
        %s268 = scalar_lea.sflag [#allocation4], %s267
        %s269 = sand.u32 %s141, 1
        %s270 = smul.addr %s269, 128
        %s271 = scalar_lea.vmem [#allocation8], %s270
        %s272 = smul.u32 16, %s23
        %s273 = smul.u32 16, %s23
        %v274 = vld [vmem:[%s237] sm:$0xff]
        %v275 = vld [vmem:[%s237 + $0x8] sm:$0xff]
        %v276 = vld [vmem:[%s237 + $0x10] sm:$0xff]
        %v277 = vld [vmem:[%s237 + $0x18] sm:$0xff]
        %v278 = vld [vmem:[%s237 + $0x20] sm:$0xff]
        %v279 = vld [vmem:[%s237 + $0x28] sm:$0xff]
        %v280 = vld [vmem:[%s237 + $0x30] sm:$0xff]
        %v281 = vld [vmem:[%s237 + $0x38] sm:$0xff]
        %v282 = vld [vmem:[%s237 + $0x40] sm:$0xff]
        %v283 = vld [vmem:[%s237 + $0x48] sm:$0xff]
        %v284 = vld [vmem:[%s237 + $0x50] sm:$0xff]
        %v285 = vld [vmem:[%s237 + $0x58] sm:$0xff]
        %v286 = vld [vmem:[%s237 + $0x60] sm:$0xff]
        %v287 = vld [vmem:[%s237 + $0x68] sm:$0xff]
        %v288 = vld [vmem:[%s237 + $0x70] sm:$0xff]
        %v289 = vld [vmem:[%s237 + $0x78] sm:$0xff]
        %v290 = vld [vmem:[#allocation5] sm:$0xff]
        %v291 = vld [vmem:[#allocation5 + $0x8] sm:$0xff]
        %v292 = vld [vmem:[#allocation5 + $0x10] sm:$0xff]
        %v293 = vld [vmem:[#allocation5 + $0x18] sm:$0xff]
        %v294 = vld [vmem:[#allocation5 + $0x20] sm:$0xff]
        %v295 = vld [vmem:[#allocation5 + $0x28] sm:$0xff]
        %v296 = vld [vmem:[#allocation5 + $0x30] sm:$0xff]
        %v297 = vld [vmem:[#allocation5 + $0x38] sm:$0xff]
        %v298 = vld [vmem:[#allocation5 + $0x40] sm:$0xff]
        %v299 = vld [vmem:[#allocation5 + $0x48] sm:$0xff]
        %v300 = vld [vmem:[#allocation5 + $0x50] sm:$0xff]
        %v301 = vld [vmem:[#allocation5 + $0x58] sm:$0xff]
        %v302 = vld [vmem:[#allocation5 + $0x60] sm:$0xff]
        %v303 = vld [vmem:[#allocation5 + $0x68] sm:$0xff]
        %v304 = vld [vmem:[#allocation5 + $0x70] sm:$0xff]
        %v305 = vld [vmem:[#allocation5 + $0x78] sm:$0xff]
        %v306 = vld [vmem:[%s2] sm:$0x1]
        %v308 = vlaneseq
        %v309 = vshrl.u32 %v308, 7
        %v310 = vsub.s32 0, %v309
        %v311 = vrot.slane %v306, %v310
        %313 = vmatprep.subr.mxu0 0.0
        %314 = vmatpush1.msra.mxu0 %v305
        %315 = vmatprep.subr.mxu0 0.0
        %316 = vmatpush1.msra.mxu0 %v304
        %317 = vmatprep.subr.mxu0 0.0
        %318 = vmatpush1.msra.mxu0 %v303
        %319 = vmatprep.subr.mxu0 0.0
        %320 = vmatpush1.msra.mxu0 %v302
        %321 = vmatprep.subr.mxu0 0.0
        %322 = vmatpush1.msra.mxu0 %v301
        %323 = vmatprep.subr.mxu0 0.0
        %324 = vmatpush1.msra.mxu0 %v300
        %325 = vmatprep.subr.mxu0 0.0
        %326 = vmatpush1.msra.mxu0 %v299
        %327 = vmatprep.subr.mxu0 0.0
        %328 = vmatpush1.msra.mxu0 %v298
        %329 = vmatprep.subr.mxu0 0.0
        %330 = vmatpush1.msra.mxu0 %v297
        %331 = vmatprep.subr.mxu0 0.0
        %332 = vmatpush1.msra.mxu0 %v296
        %333 = vmatprep.subr.mxu0 0.0
        %334 = vmatpush1.msra.mxu0 %v295
        %335 = vmatprep.subr.mxu0 0.0
        %336 = vmatpush1.msra.mxu0 %v294
        %337 = vmatprep.subr.mxu0 0.0
        %338 = vmatpush1.msra.mxu0 %v293
        %339 = vmatprep.subr.mxu0 0.0
        %340 = vmatpush1.msra.mxu0 %v292
        %341 = vmatprep.subr.mxu0 0.0
        %342 = vmatpush1.msra.mxu0 %v291
        %343 = vmatprep.subr.mxu0 0.0
        %344 = vmatpush1.msra.mxu0 %v290
        %345 = vmatprep.subr.mxu0 0.0
        %346 = vmatpush2.msra.mxu0 0.0
        %347 = vmatprep.subr.mxu0 0.0
        %348 = vmatpush2.msra.mxu0 0.0
        %349 = vmatprep.subr.mxu0 0.0
        %350 = vmatpush2.msra.mxu0 0.0
        %351 = vmatprep.subr.mxu0 0.0
        %352 = vmatpush2.msra.mxu0 0.0
        %353 = vmatprep.subr.mxu0 0.0
        %354 = vmatpush2.msra.mxu0 0.0
        %355 = vmatprep.subr.mxu0 0.0
        %356 = vmatpush2.msra.mxu0 0.0
        %357 = vmatprep.subr.mxu0 0.0
        %358 = vmatpush2.msra.mxu0 0.0
        %359 = vmatprep.subr.mxu0 0.0
        %360 = vmatpush2.msra.mxu0 0.0
        %361 = vmatprep.subr.mxu0 0.0
        %362 = vmatpush2.msra.mxu0 0.0
        %363 = vmatprep.subr.mxu0 0.0
        %364 = vmatpush2.msra.mxu0 0.0
        %365 = vmatprep.subr.mxu0 0.0
        %366 = vmatpush2.msra.mxu0 0.0
        %367 = vmatprep.subr.mxu0 0.0
        %368 = vmatpush2.msra.mxu0 0.0
        %369 = vmatprep.subr.mxu0 0.0
        %370 = vmatpush2.msra.mxu0 0.0
        %371 = vmatprep.subr.mxu0 0.0
        %372 = vmatpush2.msra.mxu0 0.0
        %373 = vmatprep.subr.mxu0 0.0
        %374 = vmatpush2.msra.mxu0 0.0
        %375 = vmatprep.subr.mxu0 0.0
        %376 = vmatpush2.msra.mxu0 0.0
        %377 = vmatprep.mubr.f32.mxu0 0.0
        %378 = vmatmul.mubr.f32.gmra.mxu0 %v274
        %v379 = vpop.f32.mrf.mxu0
        %v380 = vadd.f32 %v311, %v379
        %v381 = vpop.f32.mrf.mxu0
        %382 = vmatprep.mubr.f32.mxu0 0.0
        %383 = vmatmul.mubr.f32.gmra.mxu0 %v275
        %v384 = vpop.f32.mrf.mxu0
        %v385 = vadd.f32 %v311, %v384
        %v386 = vpop.f32.mrf.mxu0
        %387 = vmatprep.mubr.f32.mxu0 0.0
        %388 = vmatmul.mubr.f32.gmra.mxu0 %v276
        %v389 = vpop.f32.mrf.mxu0
        %v390 = vadd.f32 %v311, %v389
        %v391 = vpop.f32.mrf.mxu0
        %392 = vmatprep.mubr.f32.mxu0 0.0
        %393 = vmatmul.mubr.f32.gmra.mxu0 %v277
        %v394 = vpop.f32.mrf.mxu0
        %v395 = vadd.f32 %v311, %v394
        %v396 = vpop.f32.mrf.mxu0
        %397 = vmatprep.mubr.f32.mxu0 0.0
        %398 = vmatmul.mubr.f32.gmra.mxu0 %v278
        %v399 = vpop.f32.mrf.mxu0
        %v400 = vadd.f32 %v311, %v399
        %v401 = vpop.f32.mrf.mxu0
        %402 = vmatprep.mubr.f32.mxu0 0.0
        %403 = vmatmul.mubr.f32.gmra.mxu0 %v279
        %v404 = vpop.f32.mrf.mxu0
        %v405 = vadd.f32 %v311, %v404
        %v406 = vpop.f32.mrf.mxu0
        %407 = vmatprep.mubr.f32.mxu0 0.0
        %408 = vmatmul.mubr.f32.gmra.mxu0 %v280
        %v409 = vpop.f32.mrf.mxu0
        %v410 = vadd.f32 %v311, %v409
        %v411 = vpop.f32.mrf.mxu0
        %412 = vmatprep.mubr.f32.mxu0 0.0
        %413 = vmatmul.mubr.f32.gmra.mxu0 %v281
        %v414 = vpop.f32.mrf.mxu0
        %v415 = vadd.f32 %v311, %v414
        %v416 = vpop.f32.mrf.mxu0
        %417 = vmatprep.mubr.f32.mxu0 0.0
        %418 = vmatmul.mubr.f32.gmra.mxu0 %v282
        %v419 = vpop.f32.mrf.mxu0
        %v420 = vadd.f32 %v311, %v419
        %v421 = vpop.f32.mrf.mxu0
        %422 = vmatprep.mubr.f32.mxu0 0.0
        %423 = vmatmul.mubr.f32.gmra.mxu0 %v283
        %v424 = vpop.f32.mrf.mxu0
        %v425 = vadd.f32 %v311, %v424
        %v426 = vpop.f32.mrf.mxu0
        %427 = vmatprep.mubr.f32.mxu0 0.0
        %428 = vmatmul.mubr.f32.gmra.mxu0 %v284
        %v429 = vpop.f32.mrf.mxu0
        %v430 = vadd.f32 %v311, %v429
        %v431 = vpop.f32.mrf.mxu0
        %432 = vmatprep.mubr.f32.mxu0 0.0
        %433 = vmatmul.mubr.f32.gmra.mxu0 %v285
        %v434 = vpop.f32.mrf.mxu0
        %v435 = vadd.f32 %v311, %v434
        %v436 = vpop.f32.mrf.mxu0
        %437 = vmatprep.mubr.f32.mxu0 0.0
        %438 = vmatmul.mubr.f32.gmra.mxu0 %v286
        %v439 = vpop.f32.mrf.mxu0
        %v440 = vadd.f32 %v311, %v439
        %v441 = vpop.f32.mrf.mxu0
        %442 = vmatprep.mubr.f32.mxu0 0.0
        %443 = vmatmul.mubr.f32.gmra.mxu0 %v287
        %v444 = vpop.f32.mrf.mxu0
        %v445 = vadd.f32 %v311, %v444
        %v446 = vpop.f32.mrf.mxu0
        %447 = vmatprep.mubr.f32.mxu0 0.0
        %448 = vmatmul.mubr.f32.gmra.mxu0 %v288
        %v449 = vpop.f32.mrf.mxu0
        %v450 = vadd.f32 %v311, %v449
        %v451 = vpop.f32.mrf.mxu0
        %452 = vmatprep.mubr.f32.mxu0 0.0
        %453 = vmatmul.mubr.f32.gmra.mxu0 %v289
        %v454 = vpop.f32.mrf.mxu0
        %v455 = vadd.f32 %v311, %v454
        %v456 = vpop.f32.mrf.mxu0
        %457 = vdwg.mxu0
        %v458 = vmax.f32 %v380, 0.0
        %v459 = vmax.f32 %v385, 0.0
        %v460 = vmax.f32 %v390, 0.0
        %v461 = vmax.f32 %v395, 0.0
        %v462 = vmax.f32 %v400, 0.0
        %v463 = vmax.f32 %v405, 0.0
        %v464 = vmax.f32 %v410, 0.0
        %v465 = vmax.f32 %v415, 0.0
        %v466 = vmax.f32 %v420, 0.0
        %v467 = vmax.f32 %v425, 0.0
        %v468 = vmax.f32 %v430, 0.0
        %v469 = vmax.f32 %v435, 0.0
        %v470 = vmax.f32 %v440, 0.0
        %v471 = vmax.f32 %v445, 0.0
        %v472 = vmax.f32 %v450, 0.0
        %v473 = vmax.f32 %v455, 0.0
        %v474 = vld [vmem:[#allocation7] sm:$0xff]
        %v475 = vld [vmem:[#allocation7 + $0x8] sm:$0xff]
        %v476 = vld [vmem:[#allocation7 + $0x10] sm:$0xff]
        %v477 = vld [vmem:[#allocation7 + $0x18] sm:$0xff]
        %v478 = vld [vmem:[#allocation7 + $0x20] sm:$0xff]
        %v479 = vld [vmem:[#allocation7 + $0x28] sm:$0xff]
        %v480 = vld [vmem:[#allocation7 + $0x30] sm:$0xff]
        %v481 = vld [vmem:[#allocation7 + $0x38] sm:$0xff]
        %v482 = vld [vmem:[#allocation7 + $0x40] sm:$0xff]
        %v483 = vld [vmem:[#allocation7 + $0x48] sm:$0xff]
        %v484 = vld [vmem:[#allocation7 + $0x50] sm:$0xff]
        %v485 = vld [vmem:[#allocation7 + $0x58] sm:$0xff]
        %v486 = vld [vmem:[#allocation7 + $0x60] sm:$0xff]
        %v487 = vld [vmem:[#allocation7 + $0x68] sm:$0xff]
        %v488 = vld [vmem:[#allocation7 + $0x70] sm:$0xff]
        %v489 = vld [vmem:[#allocation7 + $0x78] sm:$0xff]
        %v490 = vld [vmem:[%s4] sm:$0x1]
        %v492 = vlaneseq
        %v493 = vshrl.u32 %v492, 7
        %v494 = vsub.s32 0, %v493
        %v495 = vrot.slane %v490, %v494
        %497 = vmatprep.subr.mxu0 0.0
        %498 = vmatpush1.msra.mxu0 %v489
        %499 = vmatprep.subr.mxu0 0.0
        %500 = vmatpush1.msra.mxu0 %v488
        %501 = vmatprep.subr.mxu0 0.0
        %502 = vmatpush1.msra.mxu0 %v487
        %503 = vmatprep.subr.mxu0 0.0
        %504 = vmatpush1.msra.mxu0 %v486
        %505 = vmatprep.subr.mxu0 0.0
        %506 = vmatpush1.msra.mxu0 %v485
        %507 = vmatprep.subr.mxu0 0.0
        %508 = vmatpush1.msra.mxu0 %v484
        %509 = vmatprep.subr.mxu0 0.0
        %510 = vmatpush1.msra.mxu0 %v483
        %511 = vmatprep.subr.mxu0 0.0
        %512 = vmatpush1.msra.mxu0 %v482
        %513 = vmatprep.subr.mxu0 0.0
        %514 = vmatpush1.msra.mxu0 %v481
        %515 = vmatprep.subr.mxu0 0.0
        %516 = vmatpush1.msra.mxu0 %v480
        %517 = vmatprep.subr.mxu0 0.0
        %518 = vmatpush1.msra.mxu0 %v479
        %519 = vmatprep.subr.mxu0 0.0
        %520 = vmatpush1.msra.mxu0 %v478
        %521 = vmatprep.subr.mxu0 0.0
        %522 = vmatpush1.msra.mxu0 %v477
        %523 = vmatprep.subr.mxu0 0.0
        %524 = vmatpush1.msra.mxu0 %v476
        %525 = vmatprep.subr.mxu0 0.0
        %526 = vmatpush1.msra.mxu0 %v475
        %527 = vmatprep.subr.mxu0 0.0
        %528 = vmatpush1.msra.mxu0 %v474
        %529 = vmatprep.subr.mxu0 0.0
        %530 = vmatpush2.msra.mxu0 0.0
        %531 = vmatprep.subr.mxu0 0.0
        %532 = vmatpush2.msra.mxu0 0.0
        %533 = vmatprep.subr.mxu0 0.0
        %534 = vmatpush2.msra.mxu0 0.0
        %535 = vmatprep.subr.mxu0 0.0
        %536 = vmatpush2.msra.mxu0 0.0
        %537 = vmatprep.subr.mxu0 0.0
        %538 = vmatpush2.msra.mxu0 0.0
        %539 = vmatprep.subr.mxu0 0.0
        %540 = vmatpush2.msra.mxu0 0.0
        %541 = vmatprep.subr.mxu0 0.0
        %542 = vmatpush2.msra.mxu0 0.0
        %543 = vmatprep.subr.mxu0 0.0
        %544 = vmatpush2.msra.mxu0 0.0
        %545 = vmatprep.subr.mxu0 0.0
        %546 = vmatpush2.msra.mxu0 0.0
        %547 = vmatprep.subr.mxu0 0.0
        %548 = vmatpush2.msra.mxu0 0.0
        %549 = vmatprep.subr.mxu0 0.0
        %550 = vmatpush2.msra.mxu0 0.0
        %551 = vmatprep.subr.mxu0 0.0
        %552 = vmatpush2.msra.mxu0 0.0
        %553 = vmatprep.subr.mxu0 0.0
        %554 = vmatpush2.msra.mxu0 0.0
        %555 = vmatprep.subr.mxu0 0.0
        %556 = vmatpush2.msra.mxu0 0.0
        %557 = vmatprep.subr.mxu0 0.0
        %558 = vmatpush2.msra.mxu0 0.0
        %559 = vmatprep.subr.mxu0 0.0
        %560 = vmatpush2.msra.mxu0 0.0
        %561 = vmatprep.mubr.f32.mxu0 0.0
        %562 = vmatmul.mubr.f32.gmra.mxu0 %v458
        %v563 = vpop.f32.mrf.mxu0
        %v564 = vadd.f32 %v495, %v563
        %v565 = vpop.f32.mrf.mxu0
        %566 = vmatprep.mubr.f32.mxu0 0.0
        %567 = vmatmul.mubr.f32.gmra.mxu0 %v459
        %v568 = vpop.f32.mrf.mxu0
        %v569 = vadd.f32 %v495, %v568
        %v570 = vpop.f32.mrf.mxu0
        %571 = vmatprep.mubr.f32.mxu0 0.0
        %572 = vmatmul.mubr.f32.gmra.mxu0 %v460
        %v573 = vpop.f32.mrf.mxu0
        %v574 = vadd.f32 %v495, %v573
        %v575 = vpop.f32.mrf.mxu0
        %576 = vmatprep.mubr.f32.mxu0 0.0
        %577 = vmatmul.mubr.f32.gmra.mxu0 %v461
        %v578 = vpop.f32.mrf.mxu0
        %v579 = vadd.f32 %v495, %v578
        %v580 = vpop.f32.mrf.mxu0
        %581 = vmatprep.mubr.f32.mxu0 0.0
        %582 = vmatmul.mubr.f32.gmra.mxu0 %v462
        %v583 = vpop.f32.mrf.mxu0
        %v584 = vadd.f32 %v495, %v583
        %v585 = vpop.f32.mrf.mxu0
        %586 = vmatprep.mubr.f32.mxu0 0.0
        %587 = vmatmul.mubr.f32.gmra.mxu0 %v463
        %v588 = vpop.f32.mrf.mxu0
        %v589 = vadd.f32 %v495, %v588
        %v590 = vpop.f32.mrf.mxu0
        %591 = vmatprep.mubr.f32.mxu0 0.0
        %592 = vmatmul.mubr.f32.gmra.mxu0 %v464
        %v593 = vpop.f32.mrf.mxu0
        %v594 = vadd.f32 %v495, %v593
        %v595 = vpop.f32.mrf.mxu0
        %596 = vmatprep.mubr.f32.mxu0 0.0
        %597 = vmatmul.mubr.f32.gmra.mxu0 %v465
        %v598 = vpop.f32.mrf.mxu0
        %v599 = vadd.f32 %v495, %v598
        %v600 = vpop.f32.mrf.mxu0
        %601 = vmatprep.mubr.f32.mxu0 0.0
        %602 = vmatmul.mubr.f32.gmra.mxu0 %v466
        %v603 = vpop.f32.mrf.mxu0
        %v604 = vadd.f32 %v495, %v603
        %v605 = vpop.f32.mrf.mxu0
        %606 = vmatprep.mubr.f32.mxu0 0.0
        %607 = vmatmul.mubr.f32.gmra.mxu0 %v467
        %v608 = vpop.f32.mrf.mxu0
        %v609 = vadd.f32 %v495, %v608
        %v610 = vpop.f32.mrf.mxu0
        %611 = vmatprep.mubr.f32.mxu0 0.0
        %612 = vmatmul.mubr.f32.gmra.mxu0 %v468
        %v613 = vpop.f32.mrf.mxu0
        %v614 = vadd.f32 %v495, %v613
        %v615 = vpop.f32.mrf.mxu0
        %616 = vmatprep.mubr.f32.mxu0 0.0
        %617 = vmatmul.mubr.f32.gmra.mxu0 %v469
        %v618 = vpop.f32.mrf.mxu0
        %v619 = vadd.f32 %v495, %v618
        %v620 = vpop.f32.mrf.mxu0
        %621 = vmatprep.mubr.f32.mxu0 0.0
        %622 = vmatmul.mubr.f32.gmra.mxu0 %v470
        %v623 = vpop.f32.mrf.mxu0
        %v624 = vadd.f32 %v495, %v623
        %v625 = vpop.f32.mrf.mxu0
        %626 = vmatprep.mubr.f32.mxu0 0.0
        %627 = vmatmul.mubr.f32.gmra.mxu0 %v471
        %v628 = vpop.f32.mrf.mxu0
        %v629 = vadd.f32 %v495, %v628
        %v630 = vpop.f32.mrf.mxu0
        %631 = vmatprep.mubr.f32.mxu0 0.0
        %632 = vmatmul.mubr.f32.gmra.mxu0 %v472
        %v633 = vpop.f32.mrf.mxu0
        %v634 = vadd.f32 %v495, %v633
        %v635 = vpop.f32.mrf.mxu0
        %636 = vmatprep.mubr.f32.mxu0 0.0
        %637 = vmatmul.mubr.f32.gmra.mxu0 %v473
        %v638 = vpop.f32.mrf.mxu0
        %v639 = vadd.f32 %v495, %v638
        %v640 = vpop.f32.mrf.mxu0
        %641 = vdwg.mxu0
        %642 = vst [vmem:[%s271] sm:$0xff] %v564
        %643 = vst [vmem:[%s271 + $0x8] sm:$0xff] %v569
        %644 = vst [vmem:[%s271 + $0x10] sm:$0xff] %v574
        %645 = vst [vmem:[%s271 + $0x18] sm:$0xff] %v579
        %646 = vst [vmem:[%s271 + $0x20] sm:$0xff] %v584
        %647 = vst [vmem:[%s271 + $0x28] sm:$0xff] %v589
        %648 = vst [vmem:[%s271 + $0x30] sm:$0xff] %v594
        %649 = vst [vmem:[%s271 + $0x38] sm:$0xff] %v599
        %650 = vst [vmem:[%s271 + $0x40] sm:$0xff] %v604
        %651 = vst [vmem:[%s271 + $0x48] sm:$0xff] %v609
        %652 = vst [vmem:[%s271 + $0x50] sm:$0xff] %v614
        %653 = vst [vmem:[%s271 + $0x58] sm:$0xff] %v619
        %654 = vst [vmem:[%s271 + $0x60] sm:$0xff] %v624
        %655 = vst [vmem:[%s271 + $0x68] sm:$0xff] %v629
        %656 = vst [vmem:[%s271 + $0x70] sm:$0xff] %v634
        %657 = vst [vmem:[%s271 + $0x78] sm:$0xff] %v639
        %s658 = sand.u32 %s141, 1
        %s659 = scalar_lea.sflag [#allocation4], %s658
        %s660 = sand.u32 %s141, 1
        %s661 = smul.addr %s660, 128
        %s662 = scalar_lea.vmem [#allocation8], %s661
        // Predicated region
        $region53: #{tpu_custom_call.1} parent=39 // pred_check
          %p663 = pneg %p151
        $region54: #{tpu_custom_call.1} parent=39 // pred_check_branch
          %665 = sbr.rel (%p663) target = $region56
        $region55: #{tpu_custom_call.1} parent=39 // pred_region
          %s666 = smul.u32 16, %s23
          %s668 = ssub.s32 2048, 2048
          %669 = vsyncadd %s659, %s668
          %s670 = smul.addr %s666, 128
          %s671 = scalar_lea.hbm %s5, %s670
          %s672 = sshll.u32 %s662, 4
          %s673 = int_to_ptr.vmem [resolvable:$true] %s672
          %678 = dma.vmem_to_hbm [thread:$0]  %s673, 2048, %s671, %s659, 128, 128, 8
        $region56: #{tpu_custom_call.1} parent=39 // pred_fallthru
          _
      $region40: #{tpu_custom_call.1} parent=5 // pred_fallthru
        _
      %p679 = scmp.le.s32.totalorder 2, %s18
      // Predicated region
      $region57: #{tpu_custom_call.1} parent=5 // pred_check
        %p680 = pneg %p679
      $region58: #{tpu_custom_call.1} parent=5 // pred_check_branch
        %682 = sbr.rel (%p680) target = $region60
      $region59: #{tpu_custom_call.1} parent=5 // pred_region
        %s683 = ssub.s32 %s18, 2
        // Predicated region
        $region61: #{tpu_custom_call.1} parent=59 // pred_check
          %p684 = pneg %p157
        $region62: #{tpu_custom_call.1} parent=59 // pred_check_branch
          %686 = sbr.rel (%p684) target = $region64
        $region63: #{tpu_custom_call.1} parent=59 // pred_region
          %s687 = sand.u32 %s142, 1
          %s688 = scalar_lea.sflag [#allocation4], %s687
          %s689 = sand.u32 %s142, 1
          %s690 = smul.addr %s689, 128
          %s691 = scalar_lea.vmem [#allocation8], %s690
          %692 = dma.done %s688, 2048
        $region64: #{tpu_custom_call.1} parent=59 // pred_fallthru
          _
      $region60: #{tpu_custom_call.1} parent=5 // pred_fallthru
        _
    $region6: #{tpu_custom_call.1} parent=1 // loop_footer
      %s22 = sadd.s32 1, %s18
    $region7: #{tpu_custom_call.1} parent=1 // loop_footer_branch
      %17 = sbr.rel target = $region3
    $region8: #{tpu_custom_call.1} parent=1 // loop_exit
      _
    %693 = vsyncpa [#allocation3], 1
    %s694 = scalar_lea.sflag [#allocation3], 1
    %695 = vsyncpa %s694, 1
    %696 = vsyncpa [#allocation6], 1
    %697 = vsyncpa [#allocation4], 1
    %s698 = scalar_lea.sflag [#allocation4], 1
    %699 = vsyncpa %s698, 1

</llo_original>
